<compile_context>
chip_gen: v7x
topology: tpu7x:2x2x1
jax: 0.10.0
libtpu: 0.0.40
codegen_flags: <defaults>
</compile_context>

<pallas_src>
import numpy as np
import jax
import jax.numpy as jnp
from jax.experimental import pallas as pl
from jax.experimental.pallas import tpu as pltpu

_LANES = 128
_STATIC_UNROLL_MAX = 8   # max middle vocab chunks to unroll statically
_VMEM_CAP = None


def _round_up(n, m):
    return ((n + m - 1) // m) * m


def _vmem_capacity_bytes():
    """Physical VMEM of the local TPU generation (conservative fallback)."""
    global _VMEM_CAP
    if _VMEM_CAP is None:
        cap = 64 << 20  # v7x per-TC value: safe lower bound everywhere
        try:
            info = pltpu.get_tpu_info()
            cap = int(getattr(info, "vmem_capacity_bytes", cap))
        except Exception:
            pass
        _VMEM_CAP = cap
    return _VMEM_CAP


def _make_argmax_kernel(v, n_chunks):
    """Argmax over the vocab axis of one (b_tile, t_tile, vp) block.

    v: true vocab size; n_chunks = vp // 128.  The last chunk's invalid tail
    lanes (padding / partial-edge DMA garbage) are replaced by -inf before the
    running compare.  First-maximal-index tie-breaking matches jnp/np.argmax.
    """
    last = n_chunks - 1
    rem_valid = v - last * _LANES          # valid lanes in the last chunk (1..128)

    def kernel(x_ref, idx_ref):
        b, t_tile, _ = x_ref.shape
        dtype = x_ref.dtype
        lane_iota = jax.lax.broadcasted_iota(jnp.int32, (b, t_tile, _LANES), 2)
        neg = jnp.array(-jnp.inf, dtype=dtype)

        def mask_last(chunk):
            if rem_valid < _LANES:
                return jnp.where(lane_iota < rem_valid, chunk, neg)
            return chunk

        if n_chunks == 1:
            best_val = mask_last(x_ref[:, :, 0:_LANES])
            best_chunk = jnp.zeros((b, t_tile, _LANES), jnp.int32)
        else:
            best_val = x_ref[:, :, 0:_LANES]
            best_chunk = jnp.zeros((b, t_tile, _LANES), jnp.int32)
            n_mid = n_chunks - 2               # full chunks 1 .. n_chunks-2
            if 0 < n_mid <= _STATIC_UNROLL_MAX:
                for c in range(1, n_chunks - 1):
                    chunk = x_ref[:, :, c * _LANES:(c + 1) * _LANES]
                    take = chunk > best_val    # strict '>' -> earlier chunk wins ties
                    best_val = jnp.where(take, chunk, best_val)
                    best_chunk = jnp.where(take, jnp.int32(c), best_chunk)
            elif n_mid > _STATIC_UNROLL_MAX:
                # Large vocab: visible loop (bounded live ranges) with modest unroll.
                def body(c, carry):
                    bv, bc = carry
                    start = pl.multiple_of(c * _LANES, _LANES)
                    chunk = x_ref[:, :, pl.ds(start, _LANES)]
                    take = chunk > bv
                    return (jnp.where(take, chunk, bv), jnp.where(take, c, bc))
                best_val, best_chunk = jax.lax.fori_loop(
                    1, n_chunks - 1, body, (best_val, best_chunk), unroll=4)
            # Last (possibly partial) chunk, masked.
            chunk = mask_last(x_ref[:, :, last * _LANES:(last + 1) * _LANES])
            take = chunk > best_val
            best_val = jnp.where(take, chunk, best_val)
            best_chunk = jnp.where(take, jnp.int32(last), best_chunk)

        # Reconstruct the global index once (saves one VPU op per chunk).
        best_idx = best_chunk * _LANES + lane_iota
        # Cross-lane finish: smallest global index achieving the row max.
        # TODO(synk): rows containing NaN can yield index vp instead of the NaN
        # position (torch.argmax returns the NaN); harmless for real logits.
        row_max = jnp.max(best_val, axis=-1, keepdims=True)
        cand = jnp.where(best_val == row_max, best_idx, jnp.int32(n_chunks * _LANES))
        idx_ref[...] = jnp.min(cand, axis=-1).astype(jnp.int32)

    return kernel


def _plan(B, T, V, itemsize):
    """Generation-aware tile sizing + explicit VMEM budget."""
    vmem_cap = _vmem_capacity_bytes()
    vp = _round_up(max(V, _LANES), _LANES)
    n_chunks = vp // _LANES

    # Total-footprint budget: ~40% of physical VMEM (~25 MiB on v7x's 64 MiB),
    # capped at 48 MiB on v5e/v6e (128 MiB), leaving pipeline/compiler headroom.
    budget = min((vmem_cap * 2) // 5, 48 << 20)
    # Cost per (batch-row x time-row): 2x double-buffered input lanes + ~6
    # lane-wide f32 register intermediates (best_val/chunk/take/iota/idx/cand)
    # + double-buffered int32 output.
    per_bt = 2 * vp * itemsize + 6 * _LANES * 4 + 2 * 4

    rows = budget // max(B * per_bt, 1)
    if rows >= _LANES:
        # Common path: full batch per block, 128-multiple time tile.
        b_tile = B
        t_tile = (rows // _LANES) * _LANES
    else:
        # Large B*V: keep the time tile at 128 (lane-dense stores) and tile the
        # batch axis instead (b_tile % 8 == 0 or b_tile == B keeps the output
        # BlockSpec legal).
        t_tile = _LANES
        max_b = budget // max(_LANES * per_bt, 1)
        if max_b >= B:
            b_tile = B
        elif max_b >= 8:
            b_tile = (max_b // 8) * 8
        else:
            b_tile = min(B, 8)
            # TODO(synk): for extreme vocabularies (V ~ 1e5+) a vocab grid axis
            # with a VMEM (best_val, best_chunk) carry would bound VMEM further.

    # Aim for >=4 grid steps along time (v7x megacore double-buffering) without
    # inflating tiny-T cases, and never exceed round_up(T, 128).
    t_tile = max(_LANES, min(t_tile,
                             _round_up(-(-T // 4), _LANES),
                             _round_up(T, _LANES)))

    footprint = b_tile * t_tile * per_bt
    vmem_limit = int(min(vmem_cap, max(32 << 20, footprint + (8 << 20))))
    return vp, n_chunks, b_tile, t_tile, vmem_limit


def _decode_impl(x):
    """Device path: pallas argmax + on-device unique_consecutive keep mask."""
    B, T, V = x.shape
    itemsize = jnp.dtype(x.dtype).itemsize
    vp, n_chunks, b_tile, t_tile, vmem_limit = _plan(B, T, V, itemsize)

    grid = (pl.cdiv(B, b_tile), pl.cdiv(T, t_tile))
    idx = pl.pallas_call(
        _make_argmax_kernel(V, n_chunks),
        out_shape=jax.ShapeDtypeStruct((B, T), jnp.int32),
        grid=grid,
        # Vocab block is vp >= V (partial edge block; garbage tail lanes are
        # masked in-kernel).  Time/batch edges are partial blocks; the output
        # writeback discards out-of-range rows automatically.
        in_specs=[pl.BlockSpec((b_tile, t_tile, vp), lambda b, t: (b, t, 0))],
        out_specs=pl.BlockSpec((b_tile, t_tile), lambda b, t: (b, t)),
        compiler_params=pltpu.CompilerParams(
            dimension_semantics=("parallel", "parallel"),
            vmem_limit_bytes=vmem_limit),
    )(x)

    # unique_consecutive(indices, dim=-1) keep mask: a time column is kept if it
    # differs from the previous column in any batch row.  idx is tiny, so this
    # runs as plain XLA inside the same jit dispatch.
    if T > 1:
        keep_tail = jnp.any(idx[:, 1:] != idx[:, :-1], axis=0)
        keep = jnp.concatenate([jnp.ones((1,), dtype=jnp.bool_), keep_tail])
    else:
        keep = jnp.ones((T,), dtype=jnp.bool_)
    return idx, keep


_decode = jax.jit(_decode_impl)


def greedy_character_decoder(x):
    """Pallas-backed equivalent of GreedyCharacterDecoder.forward.

    x: (B, T, V) logits (float32 or bfloat16).
    Returns (collapsed_indices_list, uncollapsed_indices_list).
    """
    idx, keep = _decode(x)
    idx, keep = jax.block_until_ready((idx, keep))
    idx_np = np.asarray(idx)
    keep_np = np.asarray(keep)
    # TODO(synk): the variable-length compaction (and .tolist()) has no
    # fixed-shape Pallas equivalent; it stays host-side, as in the reference.
    collapsed = idx_np[:, keep_np]
    return collapsed.tolist(), idx_np.tolist()


def _reference(x_np):
    unc = np.argmax(x_np, axis=-1)
    T = unc.shape[1]
    keep = np.ones(T, dtype=bool)
    if T > 1:
        keep[1:] = np.any(unc[:, 1:] != unc[:, :-1], axis=0)
    return unc[:, keep], unc


if __name__ == "__main__":
    key = jax.random.PRNGKey(0)
    k1, k2, k3 = jax.random.split(key, 3)

    # Case 1: typical char-CTC shape (small vocab), with duplicate time columns.
    x = jax.random.normal(k1, (2, 8, 32), dtype=jnp.float32)
    x = x.at[:, 2, :].set(x[:, 1, :])
    x = x.at[:, 5, :].set(x[:, 4, :])
    collapsed, uncollapsed = greedy_character_decoder(x)
    ref_c, ref_u = _reference(np.asarray(x))
    assert uncollapsed == ref_u.tolist(), "argmax mismatch (case 1)"
    assert collapsed == ref_c.tolist(), "unique_consecutive mismatch (case 1)"

    # Case 2: vocab > 128 -> multi-chunk running argmax + masked tail chunk.
    x2 = jax.random.normal(k2, (2, 8, 200), dtype=jnp.float32)
    x2 = x2.at[:, 4, :].set(x2[:, 3, :])
    collapsed2, uncollapsed2 = greedy_character_decoder(x2)
    ref_c2, ref_u2 = _reference(np.asarray(x2))
    assert uncollapsed2 == ref_u2.tolist(), "argmax mismatch (case 2)"
    assert collapsed2 == ref_c2.tolist(), "unique_consecutive mismatch (case 2)"

    # Case 3: T not a multiple of the time tile -> multi-step grid with a
    # partial edge block (exercises the no-pad / cdiv path).
    x3 = jax.random.normal(k3, (2, 300, 32), dtype=jnp.float32)
    x3 = x3.at[:, 100, :].set(x3[:, 99, :])
    collapsed3, uncollapsed3 = greedy_character_decoder(x3)
    ref_c3, ref_u3 = _reference(np.asarray(x3))
    assert uncollapsed3 == ref_u3.tolist(), "argmax mismatch (case 3)"
    assert collapsed3 == ref_c3.tolist(), "unique_consecutive mismatch (case 3)"

    print("KERNEL_OK")
</pallas_src>

<mosaic_0001>
module attributes {stable_mosaic.version = 11 : i64} {
  func.func @kernel(%arg0: i32, %arg1: i32, %arg2: memref<2x128x128xf32, #tpu.memory_space<vmem>>, %arg3: memref<2x128xi32, #tpu.memory_space<vmem>>) attributes {dimension_semantics = [#tpu.dimension_semantics<parallel>, #tpu.dimension_semantics<parallel>], iteration_bounds = array<i64: 1, 1>, scalar_prefetch = 0 : i64, scratch_operands = 0 : i64, tpu.core_type = #tpu.core_type<tc>, window_params = [{transform_indices = @transform_0, window_bounds = array<i64: 2, 128, 128>}, {transform_indices = @transform_1, window_bounds = array<i64: 2, 128>}]} {
    %0 = tpu.iota {dimensions = array<i32: 2>} : vector<2x128x128xi32>
    %c0 = arith.constant 0 : index
    %c0_0 = arith.constant 0 : index
    %c0_1 = arith.constant 0 : index
    %1 = vector.load %arg2[%c0, %c0_0, %c0_1] : memref<2x128x128xf32, #tpu.memory_space<vmem>>, vector<2x128x128xf32>
    %c32_i32 = arith.constant 32 : i32
    %2 = vector.broadcast %c32_i32 : i32 to vector<2x128x128xi32>
    %3 = arith.cmpi slt, %0, %2 : vector<2x128x128xi32>
    %cst = arith.constant 0xFF800000 : f32
    %4 = vector.broadcast %cst : f32 to vector<2x128x128xf32>
    %5 = arith.select %3, %1, %4 : vector<2x128x128xi1>, vector<2x128x128xf32>
    %c0_i32 = arith.constant 0 : i32
    %6 = vector.broadcast %c0_i32 : i32 to vector<2x128x128xi32>
    %c128_i32 = arith.constant 128 : i32
    %7 = vector.broadcast %c128_i32 : i32 to vector<2x128x128xi32>
    %8 = arith.muli %6, %7 : vector<2x128x128xi32>
    %9 = arith.addi %8, %0 : vector<2x128x128xi32>
    %cst_2 = arith.constant dense<0xFF800000> : vector<2x128xf32>
    %10 = vector.multi_reduction <maximumf>, %5, %cst_2 [2] : vector<2x128x128xf32> to vector<2x128xf32>
    %11 = vector.shape_cast %10 : vector<2x128xf32> to vector<2x128x1xf32>
    %12 = vector.broadcast %11 : vector<2x128x1xf32> to vector<2x128x128xf32>
    %13 = arith.cmpf oeq, %5, %12 : vector<2x128x128xf32>
    %c128_i32_3 = arith.constant 128 : i32
    %14 = vector.broadcast %c128_i32_3 : i32 to vector<2x128x128xi32>
    %15 = arith.select %13, %9, %14 : vector<2x128x128xi1>, vector<2x128x128xi32>
    %cst_4 = arith.constant dense<2147483647> : vector<2x128xi32>
    %16 = vector.multi_reduction <minsi>, %15, %cst_4 [2] : vector<2x128x128xi32> to vector<2x128xi32>
    %c0_5 = arith.constant 0 : index
    %c0_6 = arith.constant 0 : index
    %17 = vector.load %arg3[%c0_5, %c0_6] : memref<2x128xi32, #tpu.memory_space<vmem>>, vector<2x128xi32>
    tpu.vector_store %arg3[%c0_5, %c0_6], %16 {strides = array<i32>} : memref<2x128xi32, #tpu.memory_space<vmem>>, vector<2x128xi32>,
    return
  }
  func.func @transform_0(%arg0: i32, %arg1: i32) -> (i32, i32, i32) {
    %c0_i32 = arith.constant 0 : i32
    %c0_i32_0 = arith.constant 0 : i32
    return %arg0, %arg1, %c0_i32 : i32, i32, i32
  }
  func.func @transform_1(%arg0: i32, %arg1: i32) -> (i32, i32) {
    %c0_i32 = arith.constant 0 : i32
    return %arg0, %arg1 : i32, i32
  }
}

</mosaic_0001>

<llo_original>
// kernel: _decode_impl.1
$region0: #{_decode_impl.1}
  #allocation0 [shape = 'u32[]', space=smem, size = 0x4, offset = 0x4, fixed_abs, tag = 'smem constant byte address 0x4 - core index']
  #allocation1 [shape = 'u32[144,128]{1,0:T(1,128)}', space=vmem, size = 0x12000, scoped, tag = 'internal scratch']
  #allocation4 [shape = 's32[]', space=sflag, size = 0x4, offset = 0, fixed_abs, tag = 'sflag constant byte address 0x0 - dummy sync flag']
  %s0 = inlined_call_operand.hbm [shape: f32[2,8,32], index: 0, kind: input, shape index: {}]
  %s1 = inlined_call_operand.vmem [shape: s32[2,8], index: 1, kind: output, shape index: {}]
  %s2 = sld [smem:[#allocation0]]
  $region18: #{_decode_impl.1} parent=0
    _
  %s4 = ssub.s32 1, %s2
  %s5 = scalar_select 0, %s4, %s2
  $region1: #{_decode_impl.1} parent=0
    #allocation2 [shape = 'u8[131072]{0}', space=vmem, size = 0x20000, scoped, tag = 'input window, operand 0, single buffered']
    #allocation3 [shape = 's32[1]{0}', space=sflag, size = 0x4, scoped, tag = 'scoped memory for _decode_impl.1']
    %6 = vsyncpa [#allocation3], 0
    // Predicated region
    $region2: #{_decode_impl.1} parent=1 // pred_check
      _
    $region3: #{_decode_impl.1} parent=1 // pred_check_branch
      %8 = sbr.rel (0) target = $region5
    $region4: #{_decode_impl.1} parent=1 // pred_region
      #allocation5 [shape = 'u32[6]{0}', space=smem, size = 0x18, scoped, tag = 'DMA stride descriptor']
      %s10 = ssub.s32 4096, 256
      %11 = vsyncadd [#allocation3], %s10
      %s13 = sshll.u32 1, 14
      %s14 = sxor.u32 4294967295, %s13
      %s16 = sld [smem:[#allocation0]]
      %s17 = sadd.s32 2, %s16
      %s19 = sshll.u32 7, 26
      %s20 = sxor.u32 4294967295, %s19
      %s21 = sand.u32 0, %s20
      %s22 = sshll.u32 %s17, 26
      %s23 = sor.u32 %s21, %s22
      %s24 = sshll.u32 [#allocation2], 4
      %s25 = int_to_ptr.vmem [resolvable:$true] %s24
      %31 = sst [smem:[#allocation5]] 128
      %s32 = scalar_lea.smem [#allocation5], 1
      %33 = sst [smem:[%s32]] 2048
      %s34 = scalar_lea.smem [#allocation5], 2
      %35 = sst [smem:[%s34]] 1
      %s36 = scalar_lea.smem [#allocation5], 3
      %37 = sst [smem:[%s36]] 128
      %s38 = scalar_lea.smem [#allocation5], 4
      %39 = sst [smem:[%s38]] 128
      %s40 = scalar_lea.smem [#allocation5], 5
      %41 = sst [smem:[%s40]] 8
      %43 = dma.general %s0, 256, %s25, [#allocation3], [#allocation4], [#allocation5], %s23, 0
    $region5: #{_decode_impl.1} parent=1 // pred_fallthru
      _
    // Predicated region
    $region6: #{_decode_impl.1} parent=1 // pred_check
      _
    $region7: #{_decode_impl.1} parent=1 // pred_check_branch
      %45 = sbr.rel (0) target = $region9
    $region8: #{_decode_impl.1} parent=1 // pred_region
      %46 = dma.done [#allocation3], 4096
    $region9: #{_decode_impl.1} parent=1 // pred_fallthru
      _
    %v47 = vlaneseq
    %v48 = vand.u32 %v47, 127
    %v49 = vld [vmem:[#allocation2] sm:$0xff]
    %v50 = vld [vmem:[#allocation2 + $0x8] sm:$0xff]
    %v51 = vld [vmem:[#allocation2 + $0x10] sm:$0xff]
    %v52 = vld [vmem:[#allocation2 + $0x18] sm:$0xff]
    %v53 = vld [vmem:[#allocation2 + $0x20] sm:$0xff]
    %v54 = vld [vmem:[#allocation2 + $0x28] sm:$0xff]
    %v55 = vld [vmem:[#allocation2 + $0x30] sm:$0xff]
    %v56 = vld [vmem:[#allocation2 + $0x38] sm:$0xff]
    %v57 = vld [vmem:[#allocation2 + $0x40] sm:$0xff]
    %v58 = vld [vmem:[#allocation2 + $0x48] sm:$0xff]
    %v59 = vld [vmem:[#allocation2 + $0x50] sm:$0xff]
    %v60 = vld [vmem:[#allocation2 + $0x58] sm:$0xff]
    %v61 = vld [vmem:[#allocation2 + $0x60] sm:$0xff]
    %v62 = vld [vmem:[#allocation2 + $0x68] sm:$0xff]
    %v63 = vld [vmem:[#allocation2 + $0x70] sm:$0xff]
    %v64 = vld [vmem:[#allocation2 + $0x78] sm:$0xff]
    %v65 = vld [vmem:[#allocation2 + $0x80] sm:$0xff]
    %v66 = vld [vmem:[#allocation2 + $0x88] sm:$0xff]
    %v67 = vld [vmem:[#allocation2 + $0x90] sm:$0xff]
    %v68 = vld [vmem:[#allocation2 + $0x98] sm:$0xff]
    %v69 = vld [vmem:[#allocation2 + $0xa0] sm:$0xff]
    %v70 = vld [vmem:[#allocation2 + $0xa8] sm:$0xff]
    %v71 = vld [vmem:[#allocation2 + $0xb0] sm:$0xff]
    %v72 = vld [vmem:[#allocation2 + $0xb8] sm:$0xff]
    %v73 = vld [vmem:[#allocation2 + $0xc0] sm:$0xff]
    %v74 = vld [vmem:[#allocation2 + $0xc8] sm:$0xff]
    %v75 = vld [vmem:[#allocation2 + $0xd0] sm:$0xff]
    %v76 = vld [vmem:[#allocation2 + $0xd8] sm:$0xff]
    %v77 = vld [vmem:[#allocation2 + $0xe0] sm:$0xff]
    %v78 = vld [vmem:[#allocation2 + $0xe8] sm:$0xff]
    %v79 = vld [vmem:[#allocation2 + $0xf0] sm:$0xff]
    %v80 = vld [vmem:[#allocation2 + $0xf8] sm:$0xff]
    %vm81 = vcmp.lt.s32.totalorder %v48, 32
    %v82 = vsel %vm81, %v49, -inf
    %v83 = vsel %vm81, %v50, -inf
    %v84 = vsel %vm81, %v51, -inf
    %v85 = vsel %vm81, %v52, -inf
    %v86 = vsel %vm81, %v53, -inf
    %v87 = vsel %vm81, %v54, -inf
    %v88 = vsel %vm81, %v55, -inf
    %v89 = vsel %vm81, %v56, -inf
    %v90 = vsel %vm81, %v57, -inf
    %v91 = vsel %vm81, %v58, -inf
    %v92 = vsel %vm81, %v59, -inf
    %v93 = vsel %vm81, %v60, -inf
    %v94 = vsel %vm81, %v61, -inf
    %v95 = vsel %vm81, %v62, -inf
    %v96 = vsel %vm81, %v63, -inf
    %v97 = vsel %vm81, %v64, -inf
    %v98 = vsel %vm81, %v65, -inf
    %v99 = vsel %vm81, %v66, -inf
    %v100 = vsel %vm81, %v67, -inf
    %v101 = vsel %vm81, %v68, -inf
    %v102 = vsel %vm81, %v69, -inf
    %v103 = vsel %vm81, %v70, -inf
    %v104 = vsel %vm81, %v71, -inf
    %v105 = vsel %vm81, %v72, -inf
    %v106 = vsel %vm81, %v73, -inf
    %v107 = vsel %vm81, %v74, -inf
    %v108 = vsel %vm81, %v75, -inf
    %v109 = vsel %vm81, %v76, -inf
    %v110 = vsel %vm81, %v77, -inf
    %v111 = vsel %vm81, %v78, -inf
    %v112 = vsel %vm81, %v79, -inf
    %v113 = vsel %vm81, %v80, -inf
    %114 = vmax.xlane.f32.xlu0 %v82
    %v115 = vpop.xlane.xlu0 %114
    %116 = vmax.xlane.f32.xlu0 %v83
    %v117 = vpop.xlane.xlu0 %116
    %118 = vmax.xlane.f32.xlu0 %v84
    %v119 = vpop.xlane.xlu0 %118
    %120 = vmax.xlane.f32.xlu0 %v85
    %v121 = vpop.xlane.xlu0 %120
    %122 = vmax.xlane.f32.xlu0 %v86
    %v123 = vpop.xlane.xlu0 %122
    %124 = vmax.xlane.f32.xlu0 %v87
    %v125 = vpop.xlane.xlu0 %124
    %126 = vmax.xlane.f32.xlu0 %v88
    %v127 = vpop.xlane.xlu0 %126
    %128 = vmax.xlane.f32.xlu0 %v89
    %v129 = vpop.xlane.xlu0 %128
    %130 = vmax.xlane.f32.xlu0 %v90
    %v131 = vpop.xlane.xlu0 %130
    %132 = vmax.xlane.f32.xlu0 %v91
    %v133 = vpop.xlane.xlu0 %132
    %134 = vmax.xlane.f32.xlu0 %v92
    %v135 = vpop.xlane.xlu0 %134
    %136 = vmax.xlane.f32.xlu0 %v93
    %v137 = vpop.xlane.xlu0 %136
    %138 = vmax.xlane.f32.xlu0 %v94
    %v139 = vpop.xlane.xlu0 %138
    %140 = vmax.xlane.f32.xlu0 %v95
    %v141 = vpop.xlane.xlu0 %140
    %142 = vmax.xlane.f32.xlu0 %v96
    %v143 = vpop.xlane.xlu0 %142
    %144 = vmax.xlane.f32.xlu0 %v97
    %v145 = vpop.xlane.xlu0 %144
    %146 = vmax.xlane.f32.xlu0 %v98
    %v147 = vpop.xlane.xlu0 %146
    %148 = vmax.xlane.f32.xlu0 %v99
    %v149 = vpop.xlane.xlu0 %148
    %150 = vmax.xlane.f32.xlu0 %v100
    %v151 = vpop.xlane.xlu0 %150
    %152 = vmax.xlane.f32.xlu0 %v101
    %v153 = vpop.xlane.xlu0 %152
    %154 = vmax.xlane.f32.xlu0 %v102
    %v155 = vpop.xlane.xlu0 %154
    %156 = vmax.xlane.f32.xlu0 %v103
    %v157 = vpop.xlane.xlu0 %156
    %158 = vmax.xlane.f32.xlu0 %v104
    %v159 = vpop.xlane.xlu0 %158
    %160 = vmax.xlane.f32.xlu0 %v105
    %v161 = vpop.xlane.xlu0 %160
    %162 = vmax.xlane.f32.xlu0 %v106
    %v163 = vpop.xlane.xlu0 %162
    %164 = vmax.xlane.f32.xlu0 %v107
    %v165 = vpop.xlane.xlu0 %164
    %166 = vmax.xlane.f32.xlu0 %v108
    %v167 = vpop.xlane.xlu0 %166
    %168 = vmax.xlane.f32.xlu0 %v109
    %v169 = vpop.xlane.xlu0 %168
    %170 = vmax.xlane.f32.xlu0 %v110
    %v171 = vpop.xlane.xlu0 %170
    %172 = vmax.xlane.f32.xlu0 %v111
    %v173 = vpop.xlane.xlu0 %172
    %174 = vmax.xlane.f32.xlu0 %v112
    %v175 = vpop.xlane.xlu0 %174
    %176 = vmax.xlane.f32.xlu0 %v113
    %v177 = vpop.xlane.xlu0 %176
    %vm178 = vcmp.eq.f32.partialorder %v82, %v115
    %vm179 = vcmp.eq.f32.partialorder %v83, %v117
    %vm180 = vcmp.eq.f32.partialorder %v84, %v119
    %vm181 = vcmp.eq.f32.partialorder %v85, %v121
    %vm182 = vcmp.eq.f32.partialorder %v86, %v123
    %vm183 = vcmp.eq.f32.partialorder %v87, %v125
    %vm184 = vcmp.eq.f32.partialorder %v88, %v127
    %vm185 = vcmp.eq.f32.partialorder %v89, %v129
    %vm186 = vcmp.eq.f32.partialorder %v90, %v131
    %vm187 = vcmp.eq.f32.partialorder %v91, %v133
    %vm188 = vcmp.eq.f32.partialorder %v92, %v135
    %vm189 = vcmp.eq.f32.partialorder %v93, %v137
    %vm190 = vcmp.eq.f32.partialorder %v94, %v139
    %vm191 = vcmp.eq.f32.partialorder %v95, %v141
    %vm192 = vcmp.eq.f32.partialorder %v96, %v143
    %vm193 = vcmp.eq.f32.partialorder %v97, %v145
    %vm194 = vcmp.eq.f32.partialorder %v98, %v147
    %vm195 = vcmp.eq.f32.partialorder %v99, %v149
    %vm196 = vcmp.eq.f32.partialorder %v100, %v151
    %vm197 = vcmp.eq.f32.partialorder %v101, %v153
    %vm198 = vcmp.eq.f32.partialorder %v102, %v155
    %vm199 = vcmp.eq.f32.partialorder %v103, %v157
    %vm200 = vcmp.eq.f32.partialorder %v104, %v159
    %vm201 = vcmp.eq.f32.partialorder %v105, %v161
    %vm202 = vcmp.eq.f32.partialorder %v106, %v163
    %vm203 = vcmp.eq.f32.partialorder %v107, %v165
    %vm204 = vcmp.eq.f32.partialorder %v108, %v167
    %vm205 = vcmp.eq.f32.partialorder %v109, %v169
    %vm206 = vcmp.eq.f32.partialorder %v110, %v171
    %vm207 = vcmp.eq.f32.partialorder %v111, %v173
    %vm208 = vcmp.eq.f32.partialorder %v112, %v175
    %vm209 = vcmp.eq.f32.partialorder %v113, %v177
    %v210 = vsel %vm178, %v48, 128
    %v211 = vsel %vm179, %v48, 128
    %v212 = vsel %vm180, %v48, 128
    %v213 = vsel %vm181, %v48, 128
    %v214 = vsel %vm182, %v48, 128
    %v215 = vsel %vm183, %v48, 128
    %v216 = vsel %vm184, %v48, 128
    %v217 = vsel %vm185, %v48, 128
    %v218 = vsel %vm186, %v48, 128
    %v219 = vsel %vm187, %v48, 128
    %v220 = vsel %vm188, %v48, 128
    %v221 = vsel %vm189, %v48, 128
    %v222 = vsel %vm190, %v48, 128
    %v223 = vsel %vm191, %v48, 128
    %v224 = vsel %vm192, %v48, 128
    %v225 = vsel %vm193, %v48, 128
    %v226 = vsel %vm194, %v48, 128
    %v227 = vsel %vm195, %v48, 128
    %v228 = vsel %vm196, %v48, 128
    %v229 = vsel %vm197, %v48, 128
    %v230 = vsel %vm198, %v48, 128
    %v231 = vsel %vm199, %v48, 128
    %v232 = vsel %vm200, %v48, 128
    %v233 = vsel %vm201, %v48, 128
    %v234 = vsel %vm202, %v48, 128
    %v235 = vsel %vm203, %v48, 128
    %v236 = vsel %vm204, %v48, 128
    %v237 = vsel %vm205, %v48, 128
    %v238 = vsel %vm206, %v48, 128
    %v239 = vsel %vm207, %v48, 128
    %v240 = vsel %vm208, %v48, 128
    %v241 = vsel %vm209, %v48, 128
    %v242 = vand.u32 %v210, 65535
    %v243 = vshra.s32 %v210, 16
    %v244 = vcvt.s32.f32 %v242
    %v245 = vcvt.s32.f32 %v243
    %246 = vmin.xlane.f32.xlu0 %v245
    %v247 = vpop.xlane.xlu0 %246
    %vm248 = vcmp.eq.f32.partialorder %v245, %v247
    %v249 = vsel %vm248, %v244, inf
    %250 = vmin.xlane.f32.xlu0 %v249
    %v251 = vpop.xlane.xlu0 %250
    %v252 = vcvt.f32.s32 %v251
    %v253 = vcvt.f32.s32 %v247
    %v254 = vshll.u32 %v253, 16
    %v255 = vadd.s32 %v254, %v252
    %v256 = vand.u32 %v211, 65535
    %v257 = vshra.s32 %v211, 16
    %v258 = vcvt.s32.f32 %v256
    %v259 = vcvt.s32.f32 %v257
    %260 = vmin.xlane.f32.xlu0 %v259
    %v261 = vpop.xlane.xlu0 %260
    %vm262 = vcmp.eq.f32.partialorder %v259, %v261
    %v263 = vsel %vm262, %v258, inf
    %264 = vmin.xlane.f32.xlu0 %v263
    %v265 = vpop.xlane.xlu0 %264
    %v266 = vcvt.f32.s32 %v265
    %v267 = vcvt.f32.s32 %v261
    %v268 = vshll.u32 %v267, 16
    %v269 = vadd.s32 %v268, %v266
    %v270 = vand.u32 %v212, 65535
    %v271 = vshra.s32 %v212, 16
    %v272 = vcvt.s32.f32 %v270
    %v273 = vcvt.s32.f32 %v271
    %274 = vmin.xlane.f32.xlu0 %v273
    %v275 = vpop.xlane.xlu0 %274
    %vm276 = vcmp.eq.f32.partialorder %v273, %v275
    %v277 = vsel %vm276, %v272, inf
    %278 = vmin.xlane.f32.xlu0 %v277
    %v279 = vpop.xlane.xlu0 %278
    %v280 = vcvt.f32.s32 %v279
    %v281 = vcvt.f32.s32 %v275
    %v282 = vshll.u32 %v281, 16
    %v283 = vadd.s32 %v282, %v280
    %v284 = vand.u32 %v213, 65535
    %v285 = vshra.s32 %v213, 16
    %v286 = vcvt.s32.f32 %v284
    %v287 = vcvt.s32.f32 %v285
    %288 = vmin.xlane.f32.xlu0 %v287
    %v289 = vpop.xlane.xlu0 %288
    %vm290 = vcmp.eq.f32.partialorder %v287, %v289
    %v291 = vsel %vm290, %v286, inf
    %292 = vmin.xlane.f32.xlu0 %v291
    %v293 = vpop.xlane.xlu0 %292
    %v294 = vcvt.f32.s32 %v293
    %v295 = vcvt.f32.s32 %v289
    %v296 = vshll.u32 %v295, 16
    %v297 = vadd.s32 %v296, %v294
    %v298 = vand.u32 %v214, 65535
    %v299 = vshra.s32 %v214, 16
    %v300 = vcvt.s32.f32 %v298
    %v301 = vcvt.s32.f32 %v299
    %302 = vmin.xlane.f32.xlu0 %v301
    %v303 = vpop.xlane.xlu0 %302
    %vm304 = vcmp.eq.f32.partialorder %v301, %v303
    %v305 = vsel %vm304, %v300, inf
    %306 = vmin.xlane.f32.xlu0 %v305
    %v307 = vpop.xlane.xlu0 %306
    %v308 = vcvt.f32.s32 %v307
    %v309 = vcvt.f32.s32 %v303
    %v310 = vshll.u32 %v309, 16
    %v311 = vadd.s32 %v310, %v308
    %v312 = vand.u32 %v215, 65535
    %v313 = vshra.s32 %v215, 16
    %v314 = vcvt.s32.f32 %v312
    %v315 = vcvt.s32.f32 %v313
    %316 = vmin.xlane.f32.xlu0 %v315
    %v317 = vpop.xlane.xlu0 %316
    %vm318 = vcmp.eq.f32.partialorder %v315, %v317
    %v319 = vsel %vm318, %v314, inf
    %320 = vmin.xlane.f32.xlu0 %v319
    %v321 = vpop.xlane.xlu0 %320
    %v322 = vcvt.f32.s32 %v321
    %v323 = vcvt.f32.s32 %v317
    %v324 = vshll.u32 %v323, 16
    %v325 = vadd.s32 %v324, %v322
    %v326 = vand.u32 %v216, 65535
    %v327 = vshra.s32 %v216, 16
    %v328 = vcvt.s32.f32 %v326
    %v329 = vcvt.s32.f32 %v327
    %330 = vmin.xlane.f32.xlu0 %v329
    %v331 = vpop.xlane.xlu0 %330
    %vm332 = vcmp.eq.f32.partialorder %v329, %v331
    %v333 = vsel %vm332, %v328, inf
    %334 = vmin.xlane.f32.xlu0 %v333
    %v335 = vpop.xlane.xlu0 %334
    %v336 = vcvt.f32.s32 %v335
    %v337 = vcvt.f32.s32 %v331
    %v338 = vshll.u32 %v337, 16
    %v339 = vadd.s32 %v338, %v336
    %v340 = vand.u32 %v217, 65535
    %v341 = vshra.s32 %v217, 16
    %v342 = vcvt.s32.f32 %v340
    %v343 = vcvt.s32.f32 %v341
    %344 = vmin.xlane.f32.xlu0 %v343
    %v345 = vpop.xlane.xlu0 %344
    %vm346 = vcmp.eq.f32.partialorder %v343, %v345
    %v347 = vsel %vm346, %v342, inf
    %348 = vmin.xlane.f32.xlu0 %v347
    %v349 = vpop.xlane.xlu0 %348
    %v350 = vcvt.f32.s32 %v349
    %v351 = vcvt.f32.s32 %v345
    %v352 = vshll.u32 %v351, 16
    %v353 = vadd.s32 %v352, %v350
    %v354 = vand.u32 %v218, 65535
    %v355 = vshra.s32 %v218, 16
    %v356 = vcvt.s32.f32 %v354
    %v357 = vcvt.s32.f32 %v355
    %358 = vmin.xlane.f32.xlu0 %v357
    %v359 = vpop.xlane.xlu0 %358
    %vm360 = vcmp.eq.f32.partialorder %v357, %v359
    %v361 = vsel %vm360, %v356, inf
    %362 = vmin.xlane.f32.xlu0 %v361
    %v363 = vpop.xlane.xlu0 %362
    %v364 = vcvt.f32.s32 %v363
    %v365 = vcvt.f32.s32 %v359
    %v366 = vshll.u32 %v365, 16
    %v367 = vadd.s32 %v366, %v364
    %v368 = vand.u32 %v219, 65535
    %v369 = vshra.s32 %v219, 16
    %v370 = vcvt.s32.f32 %v368
    %v371 = vcvt.s32.f32 %v369
    %372 = vmin.xlane.f32.xlu0 %v371
    %v373 = vpop.xlane.xlu0 %372
    %vm374 = vcmp.eq.f32.partialorder %v371, %v373
    %v375 = vsel %vm374, %v370, inf
    %376 = vmin.xlane.f32.xlu0 %v375
    %v377 = vpop.xlane.xlu0 %376
    %v378 = vcvt.f32.s32 %v377
    %v379 = vcvt.f32.s32 %v373
    %v380 = vshll.u32 %v379, 16
    %v381 = vadd.s32 %v380, %v378
    %v382 = vand.u32 %v220, 65535
    %v383 = vshra.s32 %v220, 16
    %v384 = vcvt.s32.f32 %v382
    %v385 = vcvt.s32.f32 %v383
    %386 = vmin.xlane.f32.xlu0 %v385
    %v387 = vpop.xlane.xlu0 %386
    %vm388 = vcmp.eq.f32.partialorder %v385, %v387
    %v389 = vsel %vm388, %v384, inf
    %390 = vmin.xlane.f32.xlu0 %v389
    %v391 = vpop.xlane.xlu0 %390
    %v392 = vcvt.f32.s32 %v391
    %v393 = vcvt.f32.s32 %v387
    %v394 = vshll.u32 %v393, 16
    %v395 = vadd.s32 %v394, %v392
    %v396 = vand.u32 %v221, 65535
    %v397 = vshra.s32 %v221, 16
    %v398 = vcvt.s32.f32 %v396
    %v399 = vcvt.s32.f32 %v397
    %400 = vmin.xlane.f32.xlu0 %v399
    %v401 = vpop.xlane.xlu0 %400
    %vm402 = vcmp.eq.f32.partialorder %v399, %v401
    %v403 = vsel %vm402, %v398, inf
    %404 = vmin.xlane.f32.xlu0 %v403
    %v405 = vpop.xlane.xlu0 %404
    %v406 = vcvt.f32.s32 %v405
    %v407 = vcvt.f32.s32 %v401
    %v408 = vshll.u32 %v407, 16
    %v409 = vadd.s32 %v408, %v406
    %v410 = vand.u32 %v222, 65535
    %v411 = vshra.s32 %v222, 16
    %v412 = vcvt.s32.f32 %v410
    %v413 = vcvt.s32.f32 %v411
    %414 = vmin.xlane.f32.xlu0 %v413
    %v415 = vpop.xlane.xlu0 %414
    %vm416 = vcmp.eq.f32.partialorder %v413, %v415
    %v417 = vsel %vm416, %v412, inf
    %418 = vmin.xlane.f32.xlu0 %v417
    %v419 = vpop.xlane.xlu0 %418
    %v420 = vcvt.f32.s32 %v419
    %v421 = vcvt.f32.s32 %v415
    %v422 = vshll.u32 %v421, 16
    %v423 = vadd.s32 %v422, %v420
    %v424 = vand.u32 %v223, 65535
    %v425 = vshra.s32 %v223, 16
    %v426 = vcvt.s32.f32 %v424
    %v427 = vcvt.s32.f32 %v425
    %428 = vmin.xlane.f32.xlu0 %v427
    %v429 = vpop.xlane.xlu0 %428
    %vm430 = vcmp.eq.f32.partialorder %v427, %v429
    %v431 = vsel %vm430, %v426, inf
    %432 = vmin.xlane.f32.xlu0 %v431
    %v433 = vpop.xlane.xlu0 %432
    %v434 = vcvt.f32.s32 %v433
    %v435 = vcvt.f32.s32 %v429
    %v436 = vshll.u32 %v435, 16
    %v437 = vadd.s32 %v436, %v434
    %v438 = vand.u32 %v224, 65535
    %v439 = vshra.s32 %v224, 16
    %v440 = vcvt.s32.f32 %v438
    %v441 = vcvt.s32.f32 %v439
    %442 = vmin.xlane.f32.xlu0 %v441
    %v443 = vpop.xlane.xlu0 %442
    %vm444 = vcmp.eq.f32.partialorder %v441, %v443
    %v445 = vsel %vm444, %v440, inf
    %446 = vmin.xlane.f32.xlu0 %v445
    %v447 = vpop.xlane.xlu0 %446
    %v448 = vcvt.f32.s32 %v447
    %v449 = vcvt.f32.s32 %v443
    %v450 = vshll.u32 %v449, 16
    %v451 = vadd.s32 %v450, %v448
    %v452 = vand.u32 %v225, 65535
    %v453 = vshra.s32 %v225, 16
    %v454 = vcvt.s32.f32 %v452
    %v455 = vcvt.s32.f32 %v453
    %456 = vmin.xlane.f32.xlu0 %v455
    %v457 = vpop.xlane.xlu0 %456
    %vm458 = vcmp.eq.f32.partialorder %v455, %v457
    %v459 = vsel %vm458, %v454, inf
    %460 = vmin.xlane.f32.xlu0 %v459
    %v461 = vpop.xlane.xlu0 %460
    %v462 = vcvt.f32.s32 %v461
    %v463 = vcvt.f32.s32 %v457
    %v464 = vshll.u32 %v463, 16
    %v465 = vadd.s32 %v464, %v462
    %v466 = vand.u32 %v226, 65535
    %v467 = vshra.s32 %v226, 16
    %v468 = vcvt.s32.f32 %v466
    %v469 = vcvt.s32.f32 %v467
    %470 = vmin.xlane.f32.xlu0 %v469
    %v471 = vpop.xlane.xlu0 %470
    %vm472 = vcmp.eq.f32.partialorder %v469, %v471
    %v473 = vsel %vm472, %v468, inf
    %474 = vmin.xlane.f32.xlu0 %v473
    %v475 = vpop.xlane.xlu0 %474
    %v476 = vcvt.f32.s32 %v475
    %v477 = vcvt.f32.s32 %v471
    %v478 = vshll.u32 %v477, 16
    %v479 = vadd.s32 %v478, %v476
    %v480 = vand.u32 %v227, 65535
    %v481 = vshra.s32 %v227, 16
    %v482 = vcvt.s32.f32 %v480
    %v483 = vcvt.s32.f32 %v481
    %484 = vmin.xlane.f32.xlu0 %v483
    %v485 = vpop.xlane.xlu0 %484
    %vm486 = vcmp.eq.f32.partialorder %v483, %v485
    %v487 = vsel %vm486, %v482, inf
    %488 = vmin.xlane.f32.xlu0 %v487
    %v489 = vpop.xlane.xlu0 %488
    %v490 = vcvt.f32.s32 %v489
    %v491 = vcvt.f32.s32 %v485
    %v492 = vshll.u32 %v491, 16
    %v493 = vadd.s32 %v492, %v490
    %v494 = vand.u32 %v228, 65535
    %v495 = vshra.s32 %v228, 16
    %v496 = vcvt.s32.f32 %v494
    %v497 = vcvt.s32.f32 %v495
    %498 = vmin.xlane.f32.xlu0 %v497
    %v499 = vpop.xlane.xlu0 %498
    %vm500 = vcmp.eq.f32.partialorder %v497, %v499
    %v501 = vsel %vm500, %v496, inf
    %502 = vmin.xlane.f32.xlu0 %v501
    %v503 = vpop.xlane.xlu0 %502
    %v504 = vcvt.f32.s32 %v503
    %v505 = vcvt.f32.s32 %v499
    %v506 = vshll.u32 %v505, 16
    %v507 = vadd.s32 %v506, %v504
    %v508 = vand.u32 %v229, 65535
    %v509 = vshra.s32 %v229, 16
    %v510 = vcvt.s32.f32 %v508
    %v511 = vcvt.s32.f32 %v509
    %512 = vmin.xlane.f32.xlu0 %v511
    %v513 = vpop.xlane.xlu0 %512
    %vm514 = vcmp.eq.f32.partialorder %v511, %v513
    %v515 = vsel %vm514, %v510, inf
    %516 = vmin.xlane.f32.xlu0 %v515
    %v517 = vpop.xlane.xlu0 %516
    %v518 = vcvt.f32.s32 %v517
    %v519 = vcvt.f32.s32 %v513
    %v520 = vshll.u32 %v519, 16
    %v521 = vadd.s32 %v520, %v518
    %v522 = vand.u32 %v230, 65535
    %v523 = vshra.s32 %v230, 16
    %v524 = vcvt.s32.f32 %v522
    %v525 = vcvt.s32.f32 %v523
    %526 = vmin.xlane.f32.xlu0 %v525
    %v527 = vpop.xlane.xlu0 %526
    %vm528 = vcmp.eq.f32.partialorder %v525, %v527
    %v529 = vsel %vm528, %v524, inf
    %530 = vmin.xlane.f32.xlu0 %v529
    %v531 = vpop.xlane.xlu0 %530
    %v532 = vcvt.f32.s32 %v531
    %v533 = vcvt.f32.s32 %v527
    %v534 = vshll.u32 %v533, 16
    %v535 = vadd.s32 %v534, %v532
    %v536 = vand.u32 %v231, 65535
    %v537 = vshra.s32 %v231, 16
    %v538 = vcvt.s32.f32 %v536
    %v539 = vcvt.s32.f32 %v537
    %540 = vmin.xlane.f32.xlu0 %v539
    %v541 = vpop.xlane.xlu0 %540
    %vm542 = vcmp.eq.f32.partialorder %v539, %v541
    %v543 = vsel %vm542, %v538, inf
    %544 = vmin.xlane.f32.xlu0 %v543
    %v545 = vpop.xlane.xlu0 %544
    %v546 = vcvt.f32.s32 %v545
    %v547 = vcvt.f32.s32 %v541
    %v548 = vshll.u32 %v547, 16
    %v549 = vadd.s32 %v548, %v546
    %v550 = vand.u32 %v232, 65535
    %v551 = vshra.s32 %v232, 16
    %v552 = vcvt.s32.f32 %v550
    %v553 = vcvt.s32.f32 %v551
    %554 = vmin.xlane.f32.xlu0 %v553
    %v555 = vpop.xlane.xlu0 %554
    %vm556 = vcmp.eq.f32.partialorder %v553, %v555
    %v557 = vsel %vm556, %v552, inf
    %558 = vmin.xlane.f32.xlu0 %v557
    %v559 = vpop.xlane.xlu0 %558
    %v560 = vcvt.f32.s32 %v559
    %v561 = vcvt.f32.s32 %v555
    %v562 = vshll.u32 %v561, 16
    %v563 = vadd.s32 %v562, %v560
    %v564 = vand.u32 %v233, 65535
    %v565 = vshra.s32 %v233, 16
    %v566 = vcvt.s32.f32 %v564
    %v567 = vcvt.s32.f32 %v565
    %568 = vmin.xlane.f32.xlu0 %v567
    %v569 = vpop.xlane.xlu0 %568
    %vm570 = vcmp.eq.f32.partialorder %v567, %v569
    %v571 = vsel %vm570, %v566, inf
    %572 = vmin.xlane.f32.xlu0 %v571
    %v573 = vpop.xlane.xlu0 %572
    %v574 = vcvt.f32.s32 %v573
    %v575 = vcvt.f32.s32 %v569
    %v576 = vshll.u32 %v575, 16
    %v577 = vadd.s32 %v576, %v574
    %v578 = vand.u32 %v234, 65535
    %v579 = vshra.s32 %v234, 16
    %v580 = vcvt.s32.f32 %v578
    %v581 = vcvt.s32.f32 %v579
    %582 = vmin.xlane.f32.xlu0 %v581
    %v583 = vpop.xlane.xlu0 %582
    %vm584 = vcmp.eq.f32.partialorder %v581, %v583
    %v585 = vsel %vm584, %v580, inf
    %586 = vmin.xlane.f32.xlu0 %v585
    %v587 = vpop.xlane.xlu0 %586
    %v588 = vcvt.f32.s32 %v587
    %v589 = vcvt.f32.s32 %v583
    %v590 = vshll.u32 %v589, 16
    %v591 = vadd.s32 %v590, %v588
    %v592 = vand.u32 %v235, 65535
    %v593 = vshra.s32 %v235, 16
    %v594 = vcvt.s32.f32 %v592
    %v595 = vcvt.s32.f32 %v593
    %596 = vmin.xlane.f32.xlu0 %v595
    %v597 = vpop.xlane.xlu0 %596
    %vm598 = vcmp.eq.f32.partialorder %v595, %v597
    %v599 = vsel %vm598, %v594, inf
    %600 = vmin.xlane.f32.xlu0 %v599
    %v601 = vpop.xlane.xlu0 %600
    %v602 = vcvt.f32.s32 %v601
    %v603 = vcvt.f32.s32 %v597
    %v604 = vshll.u32 %v603, 16
    %v605 = vadd.s32 %v604, %v602
    %v606 = vand.u32 %v236, 65535
    %v607 = vshra.s32 %v236, 16
    %v608 = vcvt.s32.f32 %v606
    %v609 = vcvt.s32.f32 %v607
    %610 = vmin.xlane.f32.xlu0 %v609
    %v611 = vpop.xlane.xlu0 %610
    %vm612 = vcmp.eq.f32.partialorder %v609, %v611
    %v613 = vsel %vm612, %v608, inf
    %614 = vmin.xlane.f32.xlu0 %v613
    %v615 = vpop.xlane.xlu0 %614
    %v616 = vcvt.f32.s32 %v615
    %v617 = vcvt.f32.s32 %v611
    %v618 = vshll.u32 %v617, 16
    %v619 = vadd.s32 %v618, %v616
    %v620 = vand.u32 %v237, 65535
    %v621 = vshra.s32 %v237, 16
    %v622 = vcvt.s32.f32 %v620
    %v623 = vcvt.s32.f32 %v621
    %624 = vmin.xlane.f32.xlu0 %v623
    %v625 = vpop.xlane.xlu0 %624
    %vm626 = vcmp.eq.f32.partialorder %v623, %v625
    %v627 = vsel %vm626, %v622, inf
    %628 = vmin.xlane.f32.xlu0 %v627
    %v629 = vpop.xlane.xlu0 %628
    %v630 = vcvt.f32.s32 %v629
    %v631 = vcvt.f32.s32 %v625
    %v632 = vshll.u32 %v631, 16
    %v633 = vadd.s32 %v632, %v630
    %v634 = vand.u32 %v238, 65535
    %v635 = vshra.s32 %v238, 16
    %v636 = vcvt.s32.f32 %v634
    %v637 = vcvt.s32.f32 %v635
    %638 = vmin.xlane.f32.xlu0 %v637
    %v639 = vpop.xlane.xlu0 %638
    %vm640 = vcmp.eq.f32.partialorder %v637, %v639
    %v641 = vsel %vm640, %v636, inf
    %642 = vmin.xlane.f32.xlu0 %v641
    %v643 = vpop.xlane.xlu0 %642
    %v644 = vcvt.f32.s32 %v643
    %v645 = vcvt.f32.s32 %v639
    %v646 = vshll.u32 %v645, 16
    %v647 = vadd.s32 %v646, %v644
    %v648 = vand.u32 %v239, 65535
    %v649 = vshra.s32 %v239, 16
    %v650 = vcvt.s32.f32 %v648
    %v651 = vcvt.s32.f32 %v649
    %652 = vmin.xlane.f32.xlu0 %v651
    %v653 = vpop.xlane.xlu0 %652
    %vm654 = vcmp.eq.f32.partialorder %v651, %v653
    %v655 = vsel %vm654, %v650, inf
    %656 = vmin.xlane.f32.xlu0 %v655
    %v657 = vpop.xlane.xlu0 %656
    %v658 = vcvt.f32.s32 %v657
    %v659 = vcvt.f32.s32 %v653
    %v660 = vshll.u32 %v659, 16
    %v661 = vadd.s32 %v660, %v658
    %v662 = vand.u32 %v240, 65535
    %v663 = vshra.s32 %v240, 16
    %v664 = vcvt.s32.f32 %v662
    %v665 = vcvt.s32.f32 %v663
    %666 = vmin.xlane.f32.xlu0 %v665
    %v667 = vpop.xlane.xlu0 %666
    %vm668 = vcmp.eq.f32.partialorder %v665, %v667
    %v669 = vsel %vm668, %v664, inf
    %670 = vmin.xlane.f32.xlu0 %v669
    %v671 = vpop.xlane.xlu0 %670
    %v672 = vcvt.f32.s32 %v671
    %v673 = vcvt.f32.s32 %v667
    %v674 = vshll.u32 %v673, 16
    %v675 = vadd.s32 %v674, %v672
    %v676 = vand.u32 %v241, 65535
    %v677 = vshra.s32 %v241, 16
    %v678 = vcvt.s32.f32 %v676
    %v679 = vcvt.s32.f32 %v677
    %680 = vmin.xlane.f32.xlu0 %v679
    %v681 = vpop.xlane.xlu0 %680
    %vm682 = vcmp.eq.f32.partialorder %v679, %v681
    %v683 = vsel %vm682, %v678, inf
    %684 = vmin.xlane.f32.xlu0 %v683
    %v685 = vpop.xlane.xlu0 %684
    %v686 = vcvt.f32.s32 %v685
    %v687 = vcvt.f32.s32 %v681
    %v688 = vshll.u32 %v687, 16
    %v689 = vadd.s32 %v688, %v686
    %v690 = vlaneseq
    %v691 = vshrl.u32 %v690, 7
    %v692 = vsub.s32 %v48, %v691
    %v693 = vrot.slane %v255, %v692
    %v694 = vadd.s32 %v48, 4294967288
    %v695 = vlaneseq
    %v696 = vshrl.u32 %v695, 7
    %v697 = vsub.s32 %v694, %v696
    %v698 = vrot.slane %v269, %v697
    %vm699 = vcmask 130112
    %v700 = vsel %vm699, %v698, %v693
    %v701 = vadd.s32 %v48, 4294967280
    %v702 = vlaneseq
    %v703 = vshrl.u32 %v702, 7
    %v704 = vsub.s32 %v701, %v703
    %v705 = vrot.slane %v283, %v704
    %vm706 = vcmask 195712
    %v707 = vsel %vm706, %v705, %v700
    %v708 = vadd.s32 %v48, 4294967272
    %v709 = vlaneseq
    %v710 = vshrl.u32 %v709, 7
    %v711 = vsub.s32 %v708, %v710
    %v712 = vrot.slane %v297, %v711
    %vm713 = vcmask 261312
    %v714 = vsel %vm713, %v712, %v707
    %v715 = vadd.s32 %v48, 4294967264
    %v716 = vlaneseq
    %v717 = vshrl.u32 %v716, 7
    %v718 = vsub.s32 %v715, %v717
    %v719 = vrot.slane %v311, %v718
    %vm720 = vcmask 326912
    %v721 = vsel %vm720, %v719, %v714
    %v722 = vadd.s32 %v48, 4294967256
    %v723 = vlaneseq
    %v724 = vshrl.u32 %v723, 7
    %v725 = vsub.s32 %v722, %v724
    %v726 = vrot.slane %v325, %v725
    %vm727 = vcmask 392512
    %v728 = vsel %vm727, %v726, %v721
    %v729 = vadd.s32 %v48, 4294967248
    %v730 = vlaneseq
    %v731 = vshrl.u32 %v730, 7
    %v732 = vsub.s32 %v729, %v731
    %v733 = vrot.slane %v339, %v732
    %vm734 = vcmask 458112
    %v735 = vsel %vm734, %v733, %v728
    %v736 = vadd.s32 %v48, 4294967240
    %v737 = vlaneseq
    %v738 = vshrl.u32 %v737, 7
    %v739 = vsub.s32 %v736, %v738
    %v740 = vrot.slane %v353, %v739
    %vm741 = vcmask 523712
    %v742 = vsel %vm741, %v740, %v735
    %v743 = vadd.s32 %v48, 4294967232
    %v744 = vlaneseq
    %v745 = vshrl.u32 %v744, 7
    %v746 = vsub.s32 %v743, %v745
    %v747 = vrot.slane %v367, %v746
    %vm748 = vcmask 589312
    %v749 = vsel %vm748, %v747, %v742
    %v750 = vadd.s32 %v48, 4294967224
    %v751 = vlaneseq
    %v752 = vshrl.u32 %v751, 7
    %v753 = vsub.s32 %v750, %v752
    %v754 = vrot.slane %v381, %v753
    %vm755 = vcmask 654912
    %v756 = vsel %vm755, %v754, %v749
    %v757 = vadd.s32 %v48, 4294967216
    %v758 = vlaneseq
    %v759 = vshrl.u32 %v758, 7
    %v760 = vsub.s32 %v757, %v759
    %v761 = vrot.slane %v395, %v760
    %vm762 = vcmask 720512
    %v763 = vsel %vm762, %v761, %v756
    %v764 = vadd.s32 %v48, 4294967208
    %v765 = vlaneseq
    %v766 = vshrl.u32 %v765, 7
    %v767 = vsub.s32 %v764, %v766
    %v768 = vrot.slane %v409, %v767
    %vm769 = vcmask 786112
    %v770 = vsel %vm769, %v768, %v763
    %v771 = vadd.s32 %v48, 4294967200
    %v772 = vlaneseq
    %v773 = vshrl.u32 %v772, 7
    %v774 = vsub.s32 %v771, %v773
    %v775 = vrot.slane %v423, %v774
    %vm776 = vcmask 851712
    %v777 = vsel %vm776, %v775, %v770
    %v778 = vadd.s32 %v48, 4294967192
    %v779 = vlaneseq
    %v780 = vshrl.u32 %v779, 7
    %v781 = vsub.s32 %v778, %v780
    %v782 = vrot.slane %v437, %v781
    %vm783 = vcmask 917312
    %v784 = vsel %vm783, %v782, %v777
    %v785 = vadd.s32 %v48, 4294967184
    %v786 = vlaneseq
    %v787 = vshrl.u32 %v786, 7
    %v788 = vsub.s32 %v785, %v787
    %v789 = vrot.slane %v451, %v788
    %vm790 = vcmask 982912
    %v791 = vsel %vm790, %v789, %v784
    %v792 = vadd.s32 %v48, 4294967176
    %v793 = vlaneseq
    %v794 = vshrl.u32 %v793, 7
    %v795 = vsub.s32 %v792, %v794
    %v796 = vrot.slane %v465, %v795
    %vm797 = vcmask 1048512
    %v798 = vsel %vm797, %v796, %v791
    %v799 = vlaneseq
    %v800 = vshrl.u32 %v799, 7
    %v801 = vsub.s32 %v48, %v800
    %v802 = vrot.slane %v479, %v801
    %v803 = vlaneseq
    %v804 = vshrl.u32 %v803, 7
    %v805 = vsub.s32 %v694, %v804
    %v806 = vrot.slane %v493, %v805
    %v807 = vsel %vm699, %v806, %v802
    %v808 = vlaneseq
    %v809 = vshrl.u32 %v808, 7
    %v810 = vsub.s32 %v701, %v809
    %v811 = vrot.slane %v507, %v810
    %v812 = vsel %vm706, %v811, %v807
    %v813 = vlaneseq
    %v814 = vshrl.u32 %v813, 7
    %v815 = vsub.s32 %v708, %v814
    %v816 = vrot.slane %v521, %v815
    %v817 = vsel %vm713, %v816, %v812
    %v818 = vlaneseq
    %v819 = vshrl.u32 %v818, 7
    %v820 = vsub.s32 %v715, %v819
    %v821 = vrot.slane %v535, %v820
    %v822 = vsel %vm720, %v821, %v817
    %v823 = vlaneseq
    %v824 = vshrl.u32 %v823, 7
    %v825 = vsub.s32 %v722, %v824
    %v826 = vrot.slane %v549, %v825
    %v827 = vsel %vm727, %v826, %v822
    %v828 = vlaneseq
    %v829 = vshrl.u32 %v828, 7
    %v830 = vsub.s32 %v729, %v829
    %v831 = vrot.slane %v563, %v830
    %v832 = vsel %vm734, %v831, %v827
    %v833 = vlaneseq
    %v834 = vshrl.u32 %v833, 7
    %v835 = vsub.s32 %v736, %v834
    %v836 = vrot.slane %v577, %v835
    %v837 = vsel %vm741, %v836, %v832
    %v838 = vlaneseq
    %v839 = vshrl.u32 %v838, 7
    %v840 = vsub.s32 %v743, %v839
    %v841 = vrot.slane %v591, %v840
    %v842 = vsel %vm748, %v841, %v837
    %v843 = vlaneseq
    %v844 = vshrl.u32 %v843, 7
    %v845 = vsub.s32 %v750, %v844
    %v846 = vrot.slane %v605, %v845
    %v847 = vsel %vm755, %v846, %v842
    %v848 = vlaneseq
    %v849 = vshrl.u32 %v848, 7
    %v850 = vsub.s32 %v757, %v849
    %v851 = vrot.slane %v619, %v850
    %v852 = vsel %vm762, %v851, %v847
    %v853 = vlaneseq
    %v854 = vshrl.u32 %v853, 7
    %v855 = vsub.s32 %v764, %v854
    %v856 = vrot.slane %v633, %v855
    %v857 = vsel %vm769, %v856, %v852
    %v858 = vlaneseq
    %v859 = vshrl.u32 %v858, 7
    %v860 = vsub.s32 %v771, %v859
    %v861 = vrot.slane %v647, %v860
    %v862 = vsel %vm776, %v861, %v857
    %v863 = vlaneseq
    %v864 = vshrl.u32 %v863, 7
    %v865 = vsub.s32 %v778, %v864
    %v866 = vrot.slane %v661, %v865
    %v867 = vsel %vm783, %v866, %v862
    %v868 = vlaneseq
    %v869 = vshrl.u32 %v868, 7
    %v870 = vsub.s32 %v785, %v869
    %v871 = vrot.slane %v675, %v870
    %v872 = vsel %vm790, %v871, %v867
    %v873 = vlaneseq
    %v874 = vshrl.u32 %v873, 7
    %v875 = vsub.s32 %v792, %v874
    %v876 = vrot.slane %v689, %v875
    %v877 = vsel %vm797, %v876, %v872
    %vm878 = vcmask 1041409
    %v879 = vsel %vm878, %v877, %v798
    %880 = vst [vmem:[%s1] sm:$0x3] %v879
    // Predicated region
    $region10: #{_decode_impl.1} parent=1 // pred_check
      _
    $region11: #{_decode_impl.1} parent=1 // pred_check_branch
      %882 = sbr.rel (0) target = $region13
    $region12: #{_decode_impl.1} parent=1 // pred_region
      _
    $region13: #{_decode_impl.1} parent=1 // pred_fallthru
      _
    // Predicated region
    $region14: #{_decode_impl.1} parent=1 // pred_check
      _
    $region15: #{_decode_impl.1} parent=1 // pred_check_branch
      %884 = sbr.rel (0) target = $region17
    $region16: #{_decode_impl.1} parent=1 // pred_region
      _
    $region17: #{_decode_impl.1} parent=1 // pred_fallthru
      _
    %885 = vsyncpa [#allocation3], 1

</llo_original>
